<compile_context>
chip_gen: v6e
topology: v6e:2x2x1
jax: 0.10.0
libtpu: 0.0.40
codegen_flags: <defaults>
</compile_context>

<pallas_src>
import functools

import jax
import jax.numpy as jnp
from jax.experimental import pallas as pl
from jax.experimental.pallas import tpu as pltpu


def _round_up(x, m):
    return (x + m - 1) // m * m


def _conv_bias_relu_kernel(x_ref, w_ref, b_ref, o_ref, col_ref, *,
                           KH, KW, stride, th, Wo, S_real, Cout, apply_relu):
    """One (batch, output-row-tile) grid step.

    x_ref:   (1, Hp, Wp, Cin)        full padded image (NHWC), VMEM resident
    w_ref:   (KH*KW*Cin, Cout_pad)   flattened weights, channels zero-padded
    b_ref:   (Cout, 1)
    o_ref:   (1, Cout, th*Wo)        row-tile of the flattened NCHW output
    col_ref: (S_pad, KH*KW*Cin)      VMEM scratch for the im2col patch matrix
    """
    Cin = x_ref.shape[3]
    t = pl.program_id(1)

    # Rows of the padded input needed by this output-row tile.
    rows_needed = (th - 1) * stride + KH
    xb = x_ref[0, pl.ds(t * (th * stride), rows_needed), :, :]   # (rows, Wp, Cin)

    # ---- im2col into VMEM scratch: col[(ho, wo), (kh, kw, ci)] -------------
    # Rows of col_ref beyond S_real are never written; each output element
    # only contracts its own row, so stale rows cannot contaminate valid ones
    # and are sliced away after the transpose below.
    for kh in range(KH):
        for kw in range(KW):
            patch = xb[kh: kh + (th - 1) * stride + 1: stride,
                       kw: kw + (Wo - 1) * stride + 1: stride, :]   # (th, Wo, Cin)
            j0 = (kh * KW + kw) * Cin
            col_ref[0:S_real, j0:j0 + Cin] = patch.reshape(S_real, Cin)

    col = col_ref[...]                                    # (S_pad, K)

    # ---- one deep MXU matmul per 128-wide Cout chunk ------------------------
    n_chunks = w_ref.shape[1] // 128
    for cb in range(n_chunks):
        c0 = cb * 128
        nc = min(128, Cout - c0)                          # valid channels (static)
        acc = jnp.dot(col, w_ref[:, c0:c0 + 128],
                      preferred_element_type=jnp.float32)     # (S_pad, 128)
        acc_t = jnp.transpose(acc)                            # (128, S_pad) lane-dense
        out = acc_t[0:nc, 0:S_real] + b_ref[c0:c0 + nc, :].astype(jnp.float32)
        if apply_relu:
            out = jnp.maximum(out, 0.0)
        o_ref[0, c0:c0 + nc, :] = out.astype(o_ref.dtype)


def _pick_row_tile(Ho, Wo, max_lanes=512):
    """Largest output-row tile th (dividing Ho) with th*Wo a multiple of 128
    and <= max_lanes; prefer th < Ho so the spatial grid axis has more than
    one parallel step (megacore / multi-TensorCore chips)."""
    cands = [th for th in range(1, Ho + 1)
             if Ho % th == 0 and (th * Wo) % 128 == 0 and th * Wo <= max_lanes]
    if not cands:
        return Ho        # single spatial tile; block last dim = full extent
    smaller = [c for c in cands if c < Ho]
    return max(smaller) if smaller else max(cands)


def conv2d_forward(x_nchw, weight_oihw, bias, *,
                   stride=1, same_padding=False, relu=True):
    """Pallas forward pass of the Conv2d module: conv + bias (+ ReLU).

    x_nchw:      (N, Cin, H, W)     -- PyTorch layout
    weight_oihw: (Cout, Cin, KH, KW)
    bias:        (Cout,)
    returns:     (N, Cout, Ho, Wo)
    """
    N, Cin, H, W = x_nchw.shape
    Cout, _, KH, KW = weight_oihw.shape
    pad = (KH - 1) // 2 if same_padding else 0

    # ---- XLA-side glue: input layout + padding (input read once) ------------
    x = jnp.transpose(x_nchw, (0, 2, 3, 1))                       # NHWC
    x = jnp.pad(x, ((0, 0), (pad, pad), (pad, pad), (0, 0)))
    Hp, Wp = H + 2 * pad, W + 2 * pad
    Ho = (Hp - KH) // stride + 1
    Wo = (Wp - KW) // stride + 1

    K = KH * KW * Cin
    Cout_pad = _round_up(Cout, 128)
    # Flattened weights (K, Cout_pad): contraction ordered (kh, kw, ci);
    # padded output channels are zero and are never stored.
    w = jnp.transpose(weight_oihw, (2, 3, 1, 0)).reshape(K, Cout)
    w = jnp.pad(w.astype(x.dtype), ((0, 0), (0, Cout_pad - Cout)))
    b = bias.reshape(Cout, 1)

    th = _pick_row_tile(Ho, Wo)
    HT = Ho // th
    S_real = th * Wo
    S_pad = _round_up(S_real, 128)

    kernel = functools.partial(_conv_bias_relu_kernel,
                               KH=KH, KW=KW, stride=stride, th=th, Wo=Wo,
                               S_real=S_real, Cout=Cout, apply_relu=relu)

    # VMEM budget, using (8,128)-padded footprints of the last two dims.
    elt = x.dtype.itemsize
    in_blk = Hp * _round_up(Wp, 8) * _round_up(Cin, 128) * elt
    out_blk = _round_up(Cout, 8) * _round_up(S_real, 128) * elt
    w_blk = _round_up(K, 8) * Cout_pad * elt
    col_blk = S_pad * _round_up(K, 128) * elt
    vmem_limit = int(min(max(2 * (in_blk + out_blk) + w_blk + col_blk + (8 << 20),
                             32 << 20),
                         48 << 20))

    out_flat = pl.pallas_call(
        kernel,
        out_shape=jax.ShapeDtypeStruct((N, Cout, Ho * Wo), x.dtype),
        grid=(N, HT),
        in_specs=[
            pl.BlockSpec((1, Hp, Wp, Cin), lambda n, t: (n, 0, 0, 0)),
            pl.BlockSpec((K, Cout_pad), lambda n, t: (0, 0)),
            pl.BlockSpec((Cout, 1), lambda n, t: (0, 0)),
        ],
        out_specs=pl.BlockSpec((1, Cout, S_real), lambda n, t: (n, 0, t)),
        scratch_shapes=[pltpu.VMEM((S_pad, K), x.dtype)],
        compiler_params=pltpu.CompilerParams(
            dimension_semantics=("parallel", "parallel"),
            vmem_limit_bytes=vmem_limit),
    )(x, w, b)

    # Metadata-only reshape back to the PyTorch NCHW output layout.
    return out_flat.reshape(N, Cout, Ho, Wo)


def _reference(x_nchw, weight_oihw, bias, *, stride, same_padding, relu):
    pad = (weight_oihw.shape[2] - 1) // 2 if same_padding else 0
    y = jax.lax.conv_general_dilated(
        x_nchw, weight_oihw,
        window_strides=(stride, stride),
        padding=((pad, pad), (pad, pad)),
        dimension_numbers=("NCHW", "OIHW", "NCHW"))
    y = y + bias.reshape(1, -1, 1, 1)
    if relu:
        y = jnp.maximum(y, 0.0)
    return y


if __name__ == "__main__":
    # Deterministic small example: Conv2d(in=4, out=8, kernel=3,
    # same_padding=True, relu=True) on x of shape (2, 4, 16, 16).
    N, Cin, H, W = 2, 4, 16, 16
    Cout, Ksz = 8, 3
    stride, same_padding, relu = 1, True, True

    key = jax.random.PRNGKey(0)
    kx, kw, kb = jax.random.split(key, 3)

    x = jax.random.normal(kx, (N, Cin, H, W), dtype=jnp.float32)

    # PyTorch default Conv2d init: uniform(-1/sqrt(fan_in), 1/sqrt(fan_in)).
    fan_in = Cin * Ksz * Ksz
    bound = 1.0 / jnp.sqrt(jnp.float32(fan_in))
    weight = jax.random.uniform(kw, (Cout, Cin, Ksz, Ksz),
                                minval=-bound, maxval=bound, dtype=jnp.float32)
    bias = jax.random.uniform(kb, (Cout,),
                              minval=-bound, maxval=bound, dtype=jnp.float32)

    y = conv2d_forward(x, weight, bias,
                       stride=stride, same_padding=same_padding, relu=relu)
    y = jax.block_until_ready(y)

    y_ref = _reference(x, weight, bias,
                       stride=stride, same_padding=same_padding, relu=relu)
    assert y.shape == (N, Cout, H, W), y.shape
    max_err = float(jnp.max(jnp.abs(y - y_ref)))
    assert jnp.allclose(y, y_ref, atol=1e-5, rtol=1e-5), max_err

    print("KERNEL_OK")
</pallas_src>

<mosaic_0001>
module attributes {stable_mosaic.version = 11 : i64} {
  func.func @_conv_bias_relu_kernel(%arg0: i32, %arg1: i32, %arg2: memref<1x18x18x4xf32, #tpu.memory_space<vmem>>, %arg3: memref<36x128xf32, #tpu.memory_space<vmem>>, %arg4: memref<8x1xf32, #tpu.memory_space<vmem>>, %arg5: memref<1x8x128xf32, #tpu.memory_space<vmem>>, %arg6: memref<128x36xf32, #tpu.memory_space<vmem>>) attributes {dimension_semantics = [#tpu.dimension_semantics<parallel>, #tpu.dimension_semantics<parallel>], iteration_bounds = array<i64: 2, 2>, scalar_prefetch = 0 : i64, scratch_operands = 1 : i64, tpu.core_type = #tpu.core_type<tc>, window_params = [{transform_indices = @transform_0, window_bounds = array<i64: 1, 18, 18, 4>}, {pipeline_mode = #tpu.pipeline_mode<synchronous>, transform_indices = @transform_1, window_bounds = array<i64: 36, 128>}, {pipeline_mode = #tpu.pipeline_mode<synchronous>, transform_indices = @transform_2, window_bounds = array<i64: 8, 1>}, {transform_indices = @transform_3, window_bounds = array<i64: 1, 8, 128>}]} {
    %c8_i32 = arith.constant 8 : i32
    %0 = arith.muli %arg1, %c8_i32 : i32
    %c0 = arith.constant 0 : index
    %1 = arith.index_cast %0 : i32 to index
    %c0_0 = arith.constant 0 : index
    %c0_1 = arith.constant 0 : index
    %2 = vector.load %arg2[%c0, %1, %c0_0, %c0_1] : memref<1x18x18x4xf32, #tpu.memory_space<vmem>>, vector<1x10x18x4xf32>
    %3 = vector.shape_cast %2 : vector<1x10x18x4xf32> to vector<10x18x4xf32>
    %4 = vector.extract_strided_slice %3 {offsets = [0, 0, 0], sizes = [8, 16, 4], strides = [1, 1, 1]} : vector<10x18x4xf32> to vector<8x16x4xf32>
    %5 = vector.shape_cast %4 : vector<8x16x4xf32> to vector<128x4xf32>
    %c0_2 = arith.constant 0 : index
    %c0_3 = arith.constant 0 : index
    %6 = vector.load %arg6[%c0_2, %c0_3] : memref<128x36xf32, #tpu.memory_space<vmem>>, vector<128x4xf32>
    tpu.vector_store %arg6[%c0_2, %c0_3], %5 {strides = array<i32>} : memref<128x36xf32, #tpu.memory_space<vmem>>, vector<128x4xf32>,
    %7 = vector.extract_strided_slice %3 {offsets = [0, 1, 0], sizes = [8, 16, 4], strides = [1, 1, 1]} : vector<10x18x4xf32> to vector<8x16x4xf32>
    %8 = vector.shape_cast %7 : vector<8x16x4xf32> to vector<128x4xf32>
    %c0_4 = arith.constant 0 : index
    %c4 = arith.constant 4 : index
    %9 = vector.load %arg6[%c0_4, %c4] : memref<128x36xf32, #tpu.memory_space<vmem>>, vector<128x4xf32>
    tpu.vector_store %arg6[%c0_4, %c4], %8 {strides = array<i32>} : memref<128x36xf32, #tpu.memory_space<vmem>>, vector<128x4xf32>,
    %10 = vector.extract_strided_slice %3 {offsets = [0, 2, 0], sizes = [8, 16, 4], strides = [1, 1, 1]} : vector<10x18x4xf32> to vector<8x16x4xf32>
    %11 = vector.shape_cast %10 : vector<8x16x4xf32> to vector<128x4xf32>
    %c0_5 = arith.constant 0 : index
    %c8 = arith.constant 8 : index
    %12 = vector.load %arg6[%c0_5, %c8] : memref<128x36xf32, #tpu.memory_space<vmem>>, vector<128x4xf32>
    tpu.vector_store %arg6[%c0_5, %c8], %11 {strides = array<i32>} : memref<128x36xf32, #tpu.memory_space<vmem>>, vector<128x4xf32>,
    %13 = vector.extract_strided_slice %3 {offsets = [1, 0, 0], sizes = [8, 16, 4], strides = [1, 1, 1]} : vector<10x18x4xf32> to vector<8x16x4xf32>
    %14 = vector.shape_cast %13 : vector<8x16x4xf32> to vector<128x4xf32>
    %c0_6 = arith.constant 0 : index
    %c12 = arith.constant 12 : index
    %15 = vector.load %arg6[%c0_6, %c12] : memref<128x36xf32, #tpu.memory_space<vmem>>, vector<128x4xf32>
    tpu.vector_store %arg6[%c0_6, %c12], %14 {strides = array<i32>} : memref<128x36xf32, #tpu.memory_space<vmem>>, vector<128x4xf32>,
    %16 = vector.extract_strided_slice %3 {offsets = [1, 1, 0], sizes = [8, 16, 4], strides = [1, 1, 1]} : vector<10x18x4xf32> to vector<8x16x4xf32>
    %17 = vector.shape_cast %16 : vector<8x16x4xf32> to vector<128x4xf32>
    %c0_7 = arith.constant 0 : index
    %c16 = arith.constant 16 : index
    %18 = vector.load %arg6[%c0_7, %c16] : memref<128x36xf32, #tpu.memory_space<vmem>>, vector<128x4xf32>
    tpu.vector_store %arg6[%c0_7, %c16], %17 {strides = array<i32>} : memref<128x36xf32, #tpu.memory_space<vmem>>, vector<128x4xf32>,
    %19 = vector.extract_strided_slice %3 {offsets = [1, 2, 0], sizes = [8, 16, 4], strides = [1, 1, 1]} : vector<10x18x4xf32> to vector<8x16x4xf32>
    %20 = vector.shape_cast %19 : vector<8x16x4xf32> to vector<128x4xf32>
    %c0_8 = arith.constant 0 : index
    %c20 = arith.constant 20 : index
    %21 = vector.load %arg6[%c0_8, %c20] : memref<128x36xf32, #tpu.memory_space<vmem>>, vector<128x4xf32>
    tpu.vector_store %arg6[%c0_8, %c20], %20 {strides = array<i32>} : memref<128x36xf32, #tpu.memory_space<vmem>>, vector<128x4xf32>,
    %22 = vector.extract_strided_slice %3 {offsets = [2, 0, 0], sizes = [8, 16, 4], strides = [1, 1, 1]} : vector<10x18x4xf32> to vector<8x16x4xf32>
    %23 = vector.shape_cast %22 : vector<8x16x4xf32> to vector<128x4xf32>
    %c0_9 = arith.constant 0 : index
    %c24 = arith.constant 24 : index
    %24 = vector.load %arg6[%c0_9, %c24] : memref<128x36xf32, #tpu.memory_space<vmem>>, vector<128x4xf32>
    tpu.vector_store %arg6[%c0_9, %c24], %23 {strides = array<i32>} : memref<128x36xf32, #tpu.memory_space<vmem>>, vector<128x4xf32>,
    %25 = vector.extract_strided_slice %3 {offsets = [2, 1, 0], sizes = [8, 16, 4], strides = [1, 1, 1]} : vector<10x18x4xf32> to vector<8x16x4xf32>
    %26 = vector.shape_cast %25 : vector<8x16x4xf32> to vector<128x4xf32>
    %c0_10 = arith.constant 0 : index
    %c28 = arith.constant 28 : index
    %27 = vector.load %arg6[%c0_10, %c28] : memref<128x36xf32, #tpu.memory_space<vmem>>, vector<128x4xf32>
    tpu.vector_store %arg6[%c0_10, %c28], %26 {strides = array<i32>} : memref<128x36xf32, #tpu.memory_space<vmem>>, vector<128x4xf32>,
    %28 = vector.extract_strided_slice %3 {offsets = [2, 2, 0], sizes = [8, 16, 4], strides = [1, 1, 1]} : vector<10x18x4xf32> to vector<8x16x4xf32>
    %29 = vector.shape_cast %28 : vector<8x16x4xf32> to vector<128x4xf32>
    %c0_11 = arith.constant 0 : index
    %c32 = arith.constant 32 : index
    %30 = vector.load %arg6[%c0_11, %c32] : memref<128x36xf32, #tpu.memory_space<vmem>>, vector<128x4xf32>
    tpu.vector_store %arg6[%c0_11, %c32], %29 {strides = array<i32>} : memref<128x36xf32, #tpu.memory_space<vmem>>, vector<128x4xf32>,
    %c0_12 = arith.constant 0 : index
    %c0_13 = arith.constant 0 : index
    %31 = vector.load %arg6[%c0_12, %c0_13] : memref<128x36xf32, #tpu.memory_space<vmem>>, vector<128x36xf32>
    %c0_14 = arith.constant 0 : index
    %c0_15 = arith.constant 0 : index
    %32 = vector.load %arg3[%c0_14, %c0_15] : memref<36x128xf32, #tpu.memory_space<vmem>>, vector<36x128xf32>
    %cst = arith.constant dense<0.000000e+00> : vector<128x128xf32>
    %33 = tpu.matmul %31, %32, %cst {dimension_numbers = #tpu.dot_dimension_numbers<[1], [0], [0], [1], [0, 0, 1, 1], [], []>} : vector<128x36xf32>, vector<36x128xf32>, vector<128x128xf32> -> vector<128x128xf32>
    %34 = tpu.transpose %33, [1, 0] : vector<128x128xf32> -> vector<128x128xf32>
    %35 = vector.extract_strided_slice %34 {offsets = [0, 0], sizes = [8, 128], strides = [1, 1]} : vector<128x128xf32> to vector<8x128xf32>
    %c0_16 = arith.constant 0 : index
    %c0_17 = arith.constant 0 : index
    %36 = vector.load %arg4[%c0_16, %c0_17] : memref<8x1xf32, #tpu.memory_space<vmem>>, vector<8x1xf32>
    %37 = vector.broadcast %36 : vector<8x1xf32> to vector<8x128xf32>
    %38 = arith.addf %35, %37 : vector<8x128xf32>
    %cst_18 = arith.constant 0.000000e+00 : f32
    %39 = vector.broadcast %cst_18 : f32 to vector<8x128xf32>
    %40 = arith.maximumf %38, %39 : vector<8x128xf32>
    %c0_19 = arith.constant 0 : index
    %c0_20 = arith.constant 0 : index
    %c0_21 = arith.constant 0 : index
    %41 = vector.load %arg5[%c0_19, %c0_20, %c0_21] : memref<1x8x128xf32, #tpu.memory_space<vmem>>, vector<1x8x128xf32>
    %42 = vector.shape_cast %41 : vector<1x8x128xf32> to vector<8x128xf32>
    %43 = vector.shape_cast %40 : vector<8x128xf32> to vector<1x8x128xf32>
    tpu.vector_store %arg5[%c0_19, %c0_20, %c0_21], %43 {strides = array<i32>} : memref<1x8x128xf32, #tpu.memory_space<vmem>>, vector<1x8x128xf32>,
    return
  }
  func.func @transform_0(%arg0: i32, %arg1: i32) -> (i32, i32, i32, i32) {
    %c0_i32 = arith.constant 0 : i32
    %c0_i32_0 = arith.constant 0 : i32
    %c0_i32_1 = arith.constant 0 : i32
    %c0_i32_2 = arith.constant 0 : i32
    return %arg0, %c0_i32, %c0_i32_0, %c0_i32_1 : i32, i32, i32, i32
  }
  func.func @transform_1(%arg0: i32, %arg1: i32) -> (i32, i32) {
    %c0_i32 = arith.constant 0 : i32
    %c0_i32_0 = arith.constant 0 : i32
    %c0_i32_1 = arith.constant 0 : i32
    return %c0_i32, %c0_i32_0 : i32, i32
  }
  func.func @transform_2(%arg0: i32, %arg1: i32) -> (i32, i32) {
    %c0_i32 = arith.constant 0 : i32
    %c0_i32_0 = arith.constant 0 : i32
    %c0_i32_1 = arith.constant 0 : i32
    return %c0_i32, %c0_i32_0 : i32, i32
  }
  func.func @transform_3(%arg0: i32, %arg1: i32) -> (i32, i32, i32) {
    %c0_i32 = arith.constant 0 : i32
    %c0_i32_0 = arith.constant 0 : i32
    return %arg0, %c0_i32, %arg1 : i32, i32, i32
  }
}

</mosaic_0001>

<llo_original>
// kernel: tpu_custom_call.1
$region0: #{tpu_custom_call.1}
  #allocation0 [shape = 'u32[]', space=smem, size = 0x4, offset = 0x4, fixed_abs, tag = 'smem constant byte address 0x4 - core index']
  #allocation1 [shape = 'u32[144,128]{1,0:T(1,128)}', space=vmem, size = 0x12000, scoped, tag = 'internal scratch']
  #allocation2 [shape = 'f32[128,36]{1,0:T(8,128)}', space=vmem, size = 0x10000, scoped, tag = 'scratch operand']
  %s0 = inlined_call_operand.vmem [shape: f32[2,18,18,4], index: 0, kind: input, shape index: {}]
  %s1 = inlined_call_operand.vmem [shape: f32[36,128], index: 1, kind: input, shape index: {}]
  %s2 = inlined_call_operand.vmem [shape: f32[8,1], index: 2, kind: input, shape index: {}]
  %s3 = inlined_call_operand.hbm [shape: f32[2,8,256], index: 3, kind: output, shape index: {}]
  %s4 = sld [smem:[#allocation0]]
  $region45: #{tpu_custom_call.1} parent=0
    _
  %s6 = ssub.s32 1, %s4
  %s7 = scalar_select 0, %s6, %s4
  $region1: #{tpu_custom_call.1} parent=0
    #allocation3 [shape = 'u8[8192]{0}', space=vmem, size = 0x2000, scoped, tag = 'output window, operand 0']
    #allocation4 [shape = 's32[2]{0}', space=sflag, size = 0x8, scoped, tag = 'scoped memory for tpu_custom_call.1']
    %8 = vsyncpa [#allocation4], 0
    %s9 = scalar_lea.sflag [#allocation4], 1
    %10 = vsyncpa %s9, 0
    loop: start=0, step=1, limit=6
    $region2: #{tpu_custom_call.1} parent=1 // loop_pre_header
      _
    $region3: #{tpu_custom_call.1} parent=1 // loop_header
      %s12 = sphi 0, %s16
      %p13 = scmp.ge.s32.totalorder %s12, 6
      %s19 = sphi 0, %s31
      %s20 = sphi 0, %s27
      %s21 = sphi 0, %s19
      %s22 = sphi 0, %s20
      %s23 = sphi 0, %s21
      %s24 = sphi 0, %s22
      %s34 = sphi 0, %s36
      %s37 = sphi 0, %s34
      %s38 = sphi 0, %s37
      %s54 = sphi 0, %s38
      %s58 = sphi 0, %s58
      %s60 = sphi 0, %s58
      %s61 = sphi 0, %s60
      %s75 = sphi 0, %s61
      %s79 = sphi 0, %s79
      %s81 = sphi 0, %s79
      %s82 = sphi 0, %s81
      %s96 = sphi 0, %s82
      %s104 = sphi 0, %s106
      %s107 = sphi 0, %s104
      %s108 = sphi 0, %s107
      %s124 = sphi 0, %s108
    $region4: #{tpu_custom_call.1} parent=1 // loop_header_branch
      %15 = sbr.rel (%p13) target = $region8
    $region5: #{tpu_custom_call.1} parent=1 // loop_body
      %s17 = ssub.s32 %s12, 1
      %s18 = ssub.s32 %s12, 2
      %s25 = sadd.s32 1, %s20
      %p26 = scmp.ge.s32.totalorder %s25, 2
      %s27 = scalar_select %p26, 0, %s25
      %s28 = sadd.s32 1, %s19
      %s29 = scalar_select %p26, %s28, %s19
      %p30 = scmp.ge.s32.totalorder %s29, 2
      %s31 = scalar_select %p30, 0, %s29
      %s32 = ssub.s32 %s19, %s31
      %p33 = scmp.eq.s32.totalorder %s32, 0
      %s35 = sadd.s32 %s34, 1
      %s36 = scalar_select %p33, %s34, %s35
      %p39 = pneg %p33
      %p40 = scmp.eq.s32.totalorder %s12, 3
      %p41 = por %p39, %p40
      %p42 = scmp.ne.s32.totalorder %s34, %s37
      %p43 = scmp.eq.s32.totalorder %s12, 0
      %p44 = por %p42, %p43
      %p45 = scmp.ne.s32.totalorder %s34, %s37
      %p46 = scmp.eq.s32.totalorder %s17, 3
      %p47 = por %p45, %p46
      %p48 = scmp.ne.s32.totalorder %s37, %s38
      %p49 = scmp.eq.s32.totalorder %s17, 0
      %p50 = por %p48, %p49
      %p51 = scmp.ne.s32.totalorder %s37, %s38
      %p52 = scmp.eq.s32.totalorder %s18, 3
      %p53 = por %p51, %p52
      %p55 = scmp.ne.s32.totalorder %s38, %s54
      %p56 = scmp.eq.s32.totalorder %s18, 0
      %p57 = por %p55, %p56
      %s59 = sadd.s32 %s58, 1
      %p62 = scmp.eq.s32.totalorder %s12, 3
      %p63 = scmp.ne.s32.totalorder %s58, %s60
      %p64 = scmp.eq.s32.totalorder %s12, 0
      %p65 = por %p63, %p64
      %p66 = scmp.ne.s32.totalorder %s58, %s60
      %p67 = scmp.eq.s32.totalorder %s17, 3
      %p68 = por %p66, %p67
      %p69 = scmp.ne.s32.totalorder %s60, %s61
      %p70 = scmp.eq.s32.totalorder %s17, 0
      %p71 = por %p69, %p70
      %p72 = scmp.ne.s32.totalorder %s60, %s61
      %p73 = scmp.eq.s32.totalorder %s18, 3
      %p74 = por %p72, %p73
      %p76 = scmp.ne.s32.totalorder %s61, %s75
      %p77 = scmp.eq.s32.totalorder %s18, 0
      %p78 = por %p76, %p77
      %s80 = sadd.s32 %s79, 1
      %p83 = scmp.eq.s32.totalorder %s12, 3
      %p84 = scmp.ne.s32.totalorder %s79, %s81
      %p85 = scmp.eq.s32.totalorder %s12, 0
      %p86 = por %p84, %p85
      %p87 = scmp.ne.s32.totalorder %s79, %s81
      %p88 = scmp.eq.s32.totalorder %s17, 3
      %p89 = por %p87, %p88
      %p90 = scmp.ne.s32.totalorder %s81, %s82
      %p91 = scmp.eq.s32.totalorder %s17, 0
      %p92 = por %p90, %p91
      %p93 = scmp.ne.s32.totalorder %s81, %s82
      %p94 = scmp.eq.s32.totalorder %s18, 3
      %p95 = por %p93, %p94
      %p97 = scmp.ne.s32.totalorder %s82, %s96
      %p98 = scmp.eq.s32.totalorder %s18, 0
      %p99 = por %p97, %p98
      %s100 = ssub.s32 %s19, %s31
      %s101 = ssub.s32 %s20, %s27
      %s102 = sor.u32 %s100, %s101
      %p103 = scmp.eq.s32.totalorder %s102, 0
      %s105 = sadd.s32 %s104, 1
      %s106 = scalar_select %p103, %s104, %s105
      %p109 = pneg %p103
      %p110 = scmp.eq.s32.totalorder %s12, 3
      %p111 = por %p109, %p110
      %p112 = scmp.ne.s32.totalorder %s104, %s107
      %p113 = scmp.eq.s32.totalorder %s12, 0
      %p114 = por %p112, %p113
      %p115 = scmp.ne.s32.totalorder %s104, %s107
      %p116 = scmp.eq.s32.totalorder %s17, 3
      %p117 = por %p115, %p116
      %p118 = scmp.ne.s32.totalorder %s107, %s108
      %p119 = scmp.eq.s32.totalorder %s17, 0
      %p120 = por %p118, %p119
      %p121 = scmp.ne.s32.totalorder %s107, %s108
      %p122 = scmp.eq.s32.totalorder %s18, 3
      %p123 = por %p121, %p122
      %p125 = scmp.ne.s32.totalorder %s108, %s124
      %p126 = scmp.eq.s32.totalorder %s18, 0
      %p127 = por %p125, %p126
      %p128 = scmp.le.s32.totalorder 1, %s12
      %p129 = scmp.lt.s32.totalorder %s12, 5
      %p130 = pnand %p128, %p129
      %p131 = pneg %p130
      // Predicated region
      $region9: #{tpu_custom_call.1} parent=5 // pred_check
        _
      $region10: #{tpu_custom_call.1} parent=5 // pred_check_branch
        %133 = sbr.rel (%p130) target = $region12
      $region11: #{tpu_custom_call.1} parent=5 // pred_region
        %s134 = ssub.s32 %s12, 1
        // Predicated region
        $region13: #{tpu_custom_call.1} parent=11 // pred_check
          %p135 = pneg %p71
        $region14: #{tpu_custom_call.1} parent=11 // pred_check_branch
          %137 = sbr.rel (%p135) target = $region16
        $region15: #{tpu_custom_call.1} parent=11 // pred_region
          _
        $region16: #{tpu_custom_call.1} parent=11 // pred_fallthru
          _
        // Predicated region
        $region17: #{tpu_custom_call.1} parent=11 // pred_check
          %p138 = pneg %p92
        $region18: #{tpu_custom_call.1} parent=11 // pred_check_branch
          %140 = sbr.rel (%p138) target = $region20
        $region19: #{tpu_custom_call.1} parent=11 // pred_region
          _
        $region20: #{tpu_custom_call.1} parent=11 // pred_fallthru
          _
      $region12: #{tpu_custom_call.1} parent=5 // pred_fallthru
        _
      %p141 = scmp.lt.s32.totalorder %s12, 4
      // Predicated region
      $region21: #{tpu_custom_call.1} parent=5 // pred_check
        %p142 = pneg %p141
      $region22: #{tpu_custom_call.1} parent=5 // pred_check_branch
        %144 = sbr.rel (%p142) target = $region24
      $region23: #{tpu_custom_call.1} parent=5 // pred_region
        // Predicated region
        $region25: #{tpu_custom_call.1} parent=23 // pred_check
          %p145 = pneg %p44
        $region26: #{tpu_custom_call.1} parent=23 // pred_check_branch
          %147 = sbr.rel (%p145) target = $region28
        $region27: #{tpu_custom_call.1} parent=23 // pred_region
          %p148 = scmp.lt.s32.totalorder %s19, 1
          %s149 = scalar_select %p148, %s19, 1
          %s150 = smul.addr %s149, 54
          %s151 = smul.addr %s150, 8
          %s152 = scalar_lea.vmem %s0, %s151
        $region28: #{tpu_custom_call.1} parent=23 // pred_fallthru
          _
      $region24: #{tpu_custom_call.1} parent=5 // pred_fallthru
        _
      %p153 = scmp.le.s32.totalorder 1, %s12
      %p154 = scmp.lt.s32.totalorder %s12, 5
      %p155 = pnand %p153, %p154
      %p156 = pneg %p155
      // Predicated region
      $region29: #{tpu_custom_call.1} parent=5 // pred_check
        _
      $region30: #{tpu_custom_call.1} parent=5 // pred_check_branch
        %158 = sbr.rel (%p155) target = $region32
      $region31: #{tpu_custom_call.1} parent=5 // pred_region
        %s159 = ssub.s32 %s12, 1
        %p160 = scmp.lt.s32.totalorder %s21, 1
        %s161 = scalar_select %p160, %s21, 1
        %s162 = smul.addr %s161, 54
        %s163 = smul.addr %s162, 8
        %s164 = scalar_lea.vmem %s0, %s163
        %p165 = pneg %p50
        %p166 = pneg %p47
        %p167 = pneg %p71
        %p168 = pneg %p68
        %p169 = pneg %p92
        %p170 = pneg %p89
        %p171 = pneg %p120
        %p172 = pneg %p117
        %s173 = sand.u32 %s107, 1
        %s174 = scalar_lea.sflag [#allocation4], %s173
        %s175 = sand.u32 %s107, 1
        %s176 = smul.addr %s175, 8
        %s177 = scalar_lea.vmem [#allocation3], %s176
        %p178 = scmp.lt.s32.totalorder %s21, 1
        %s179 = scalar_select %p178, %s21, 1
        %s180 = smul.addr %s179, 54
        %s181 = smul.addr %s180, 8
        %s182 = scalar_lea.vmem %s0, %s181
        %s183 = smul.u32 %s22, 8
        %s184 = smul.u32 %s183, 24
        %s185 = scalar_lea.vmem %s182, %s184
        %v186 = vld [vmem:[%s185] sm:$0xff]
        %v187 = vld [vmem:[%s185 + $0x8] sm:$0xff]
        %v188 = vld [vmem:[%s185 + $0x10] sm:$0x3]
        %v189 = vld [vmem:[%s185 + $0x18] sm:$0xff]
        %v190 = vld [vmem:[%s185 + $0x20] sm:$0xff]
        %v191 = vld [vmem:[%s185 + $0x28] sm:$0x3]
        %v192 = vld [vmem:[%s185 + $0x30] sm:$0xff]
        %v193 = vld [vmem:[%s185 + $0x38] sm:$0xff]
        %v194 = vld [vmem:[%s185 + $0x40] sm:$0x3]
        %v195 = vld [vmem:[%s185 + $0x48] sm:$0xff]
        %v196 = vld [vmem:[%s185 + $0x50] sm:$0xff]
        %v197 = vld [vmem:[%s185 + $0x58] sm:$0x3]
        %v198 = vld [vmem:[%s185 + $0x60] sm:$0xff]
        %v199 = vld [vmem:[%s185 + $0x68] sm:$0xff]
        %v200 = vld [vmem:[%s185 + $0x70] sm:$0x3]
        %v201 = vld [vmem:[%s185 + $0x78] sm:$0xff]
        %v202 = vld [vmem:[%s185 + $0x80] sm:$0xff]
        %v203 = vld [vmem:[%s185 + $0x88] sm:$0x3]
        %v204 = vld [vmem:[%s185 + $0x90] sm:$0xff]
        %v205 = vld [vmem:[%s185 + $0x98] sm:$0xff]
        %v206 = vld [vmem:[%s185 + $0xa0] sm:$0x3]
        %v207 = vld [vmem:[%s185 + $0xa8] sm:$0xff]
        %v208 = vld [vmem:[%s185 + $0xb0] sm:$0xff]
        %v209 = vld [vmem:[%s185 + $0xb8] sm:$0x3]
        %v210 = vld [vmem:[%s185 + $0xc0] sm:$0xff]
        %v211 = vld [vmem:[%s185 + $0xc8] sm:$0xff]
        %v212 = vld [vmem:[%s185 + $0xd0] sm:$0x3]
        %v213 = vld [vmem:[%s185 + $0xd8] sm:$0xff]
        %v214 = vld [vmem:[%s185 + $0xe0] sm:$0xff]
        %v215 = vld [vmem:[%s185 + $0xe8] sm:$0x3]
        %vm216 = vcmask 31744
        %217 = vst.msk [vmem:[#allocation2] sm:$0xff] %vm216, %v186
        %218 = vst.msk [vmem:[#allocation2 + $0x8] sm:$0xff] %vm216, %v187
        %219 = vst.msk [vmem:[#allocation2 + $0x10] sm:$0xff] %vm216, %v189
        %220 = vst.msk [vmem:[#allocation2 + $0x18] sm:$0xff] %vm216, %v190
        %221 = vst.msk [vmem:[#allocation2 + $0x20] sm:$0xff] %vm216, %v192
        %222 = vst.msk [vmem:[#allocation2 + $0x28] sm:$0xff] %vm216, %v193
        %223 = vst.msk [vmem:[#allocation2 + $0x30] sm:$0xff] %vm216, %v195
        %224 = vst.msk [vmem:[#allocation2 + $0x38] sm:$0xff] %vm216, %v196
        %225 = vst.msk [vmem:[#allocation2 + $0x40] sm:$0xff] %vm216, %v198
        %226 = vst.msk [vmem:[#allocation2 + $0x48] sm:$0xff] %vm216, %v199
        %227 = vst.msk [vmem:[#allocation2 + $0x50] sm:$0xff] %vm216, %v201
        %228 = vst.msk [vmem:[#allocation2 + $0x58] sm:$0xff] %vm216, %v202
        %229 = vst.msk [vmem:[#allocation2 + $0x60] sm:$0xff] %vm216, %v204
        %230 = vst.msk [vmem:[#allocation2 + $0x68] sm:$0xff] %vm216, %v205
        %231 = vst.msk [vmem:[#allocation2 + $0x70] sm:$0xff] %vm216, %v207
        %232 = vst.msk [vmem:[#allocation2 + $0x78] sm:$0xff] %vm216, %v208
        %vm257 = vcmask 1046528
        %v258 = vrot.slane %v186, 1
        %v259 = vrot.slane %v187, 1
        %v260 = vsel %vm257, %v258, %v259
        %v261 = vrot.slane %v188, 1
        %v262 = vsel %vm257, %v259, %v261
        %v263 = vrot.slane %v189, 1
        %v264 = vrot.slane %v190, 1
        %v265 = vsel %vm257, %v263, %v264
        %v266 = vrot.slane %v191, 1
        %v267 = vsel %vm257, %v264, %v266
        %v268 = vrot.slane %v192, 1
        %v269 = vrot.slane %v193, 1
        %v270 = vsel %vm257, %v268, %v269
        %v271 = vrot.slane %v194, 1
        %v272 = vsel %vm257, %v269, %v271
        %v273 = vrot.slane %v195, 1
        %v274 = vrot.slane %v196, 1
        %v275 = vsel %vm257, %v273, %v274
        %v276 = vrot.slane %v197, 1
        %v277 = vsel %vm257, %v274, %v276
        %v278 = vrot.slane %v198, 1
        %v279 = vrot.slane %v199, 1
        %v280 = vsel %vm257, %v278, %v279
        %v281 = vrot.slane %v200, 1
        %v282 = vsel %vm257, %v279, %v281
        %v283 = vrot.slane %v201, 1
        %v284 = vrot.slane %v202, 1
        %v285 = vsel %vm257, %v283, %v284
        %v286 = vrot.slane %v203, 1
        %v287 = vsel %vm257, %v284, %v286
        %v288 = vrot.slane %v204, 1
        %v289 = vrot.slane %v205, 1
        %v290 = vsel %vm257, %v288, %v289
        %v291 = vrot.slane %v206, 1
        %v292 = vsel %vm257, %v289, %v291
        %v293 = vrot.slane %v207, 1
        %v294 = vrot.slane %v208, 1
        %v295 = vsel %vm257, %v293, %v294
        %v296 = vrot.slane %v209, 1
        %v297 = vsel %vm257, %v294, %v296
        %298 = vrot.lane.b32.xlu0 %v260, 4
        %v299 = vpop.permute.xlu0 %298
        %300 = vrot.lane.b32.xlu0 %v262, 4
        %v301 = vpop.permute.xlu0 %300
        %302 = vrot.lane.b32.xlu0 %v265, 4
        %v303 = vpop.permute.xlu0 %302
        %304 = vrot.lane.b32.xlu0 %v267, 4
        %v305 = vpop.permute.xlu0 %304
        %306 = vrot.lane.b32.xlu0 %v270, 4
        %v307 = vpop.permute.xlu0 %306
        %308 = vrot.lane.b32.xlu0 %v272, 4
        %v309 = vpop.permute.xlu0 %308
        %310 = vrot.lane.b32.xlu0 %v275, 4
        %v311 = vpop.permute.xlu0 %310
        %312 = vrot.lane.b32.xlu0 %v277, 4
        %v313 = vpop.permute.xlu0 %312
        %314 = vrot.lane.b32.xlu0 %v280, 4
        %v315 = vpop.permute.xlu0 %314
        %316 = vrot.lane.b32.xlu0 %v282, 4
        %v317 = vpop.permute.xlu0 %316
        %318 = vrot.lane.b32.xlu0 %v285, 4
        %v319 = vpop.permute.xlu0 %318
        %320 = vrot.lane.b32.xlu0 %v287, 4
        %v321 = vpop.permute.xlu0 %320
        %322 = vrot.lane.b32.xlu0 %v290, 4
        %v323 = vpop.permute.xlu0 %322
        %324 = vrot.lane.b32.xlu0 %v292, 4
        %v325 = vpop.permute.xlu0 %324
        %326 = vrot.lane.b32.xlu0 %v295, 4
        %v327 = vpop.permute.xlu0 %326
        %328 = vrot.lane.b32.xlu0 %v297, 4
        %v329 = vpop.permute.xlu0 %328
        %vm346 = vcmask 64544
        %347 = vst.msk [vmem:[#allocation2] sm:$0xff] %vm346, %v299
        %348 = vst.msk [vmem:[#allocation2 + $0x8] sm:$0xff] %vm346, %v301
        %349 = vst.msk [vmem:[#allocation2 + $0x10] sm:$0xff] %vm346, %v303
        %350 = vst.msk [vmem:[#allocation2 + $0x18] sm:$0xff] %vm346, %v305
        %351 = vst.msk [vmem:[#allocation2 + $0x20] sm:$0xff] %vm346, %v307
        %352 = vst.msk [vmem:[#allocation2 + $0x28] sm:$0xff] %vm346, %v309
        %353 = vst.msk [vmem:[#allocation2 + $0x30] sm:$0xff] %vm346, %v311
        %354 = vst.msk [vmem:[#allocation2 + $0x38] sm:$0xff] %vm346, %v313
        %355 = vst.msk [vmem:[#allocation2 + $0x40] sm:$0xff] %vm346, %v315
        %356 = vst.msk [vmem:[#allocation2 + $0x48] sm:$0xff] %vm346, %v317
        %357 = vst.msk [vmem:[#allocation2 + $0x50] sm:$0xff] %vm346, %v319
        %358 = vst.msk [vmem:[#allocation2 + $0x58] sm:$0xff] %vm346, %v321
        %359 = vst.msk [vmem:[#allocation2 + $0x60] sm:$0xff] %vm346, %v323
        %360 = vst.msk [vmem:[#allocation2 + $0x68] sm:$0xff] %vm346, %v325
        %361 = vst.msk [vmem:[#allocation2 + $0x70] sm:$0xff] %vm346, %v327
        %362 = vst.msk [vmem:[#allocation2 + $0x78] sm:$0xff] %vm346, %v329
        %vm363 = vcmask 1045504
        %v364 = vrot.slane %v186, 2
        %v365 = vrot.slane %v187, 2
        %v366 = vsel %vm363, %v364, %v365
        %v367 = vrot.slane %v188, 2
        %v368 = vsel %vm363, %v365, %v367
        %v369 = vrot.slane %v189, 2
        %v370 = vrot.slane %v190, 2
        %v371 = vsel %vm363, %v369, %v370
        %v372 = vrot.slane %v191, 2
        %v373 = vsel %vm363, %v370, %v372
        %v374 = vrot.slane %v192, 2
        %v375 = vrot.slane %v193, 2
        %v376 = vsel %vm363, %v374, %v375
        %v377 = vrot.slane %v194, 2
        %v378 = vsel %vm363, %v375, %v377
        %v379 = vrot.slane %v195, 2
        %v380 = vrot.slane %v196, 2
        %v381 = vsel %vm363, %v379, %v380
        %v382 = vrot.slane %v197, 2
        %v383 = vsel %vm363, %v380, %v382
        %v384 = vrot.slane %v198, 2
        %v385 = vrot.slane %v199, 2
        %v386 = vsel %vm363, %v384, %v385
        %v387 = vrot.slane %v200, 2
        %v388 = vsel %vm363, %v385, %v387
        %v389 = vrot.slane %v201, 2
        %v390 = vrot.slane %v202, 2
        %v391 = vsel %vm363, %v389, %v390
        %v392 = vrot.slane %v203, 2
        %v393 = vsel %vm363, %v390, %v392
        %v394 = vrot.slane %v204, 2
        %v395 = vrot.slane %v205, 2
        %v396 = vsel %vm363, %v394, %v395
        %v397 = vrot.slane %v206, 2
        %v398 = vsel %vm363, %v395, %v397
        %v399 = vrot.slane %v207, 2
        %v400 = vrot.slane %v208, 2
        %v401 = vsel %vm363, %v399, %v400
        %v402 = vrot.slane %v209, 2
        %v403 = vsel %vm363, %v400, %v402
        %404 = vrot.lane.b32.xlu0 %v366, 8
        %v405 = vpop.permute.xlu0 %404
        %406 = vrot.lane.b32.xlu0 %v368, 8
        %v407 = vpop.permute.xlu0 %406
        %408 = vrot.lane.b32.xlu0 %v371, 8
        %v409 = vpop.permute.xlu0 %408
        %410 = vrot.lane.b32.xlu0 %v373, 8
        %v411 = vpop.permute.xlu0 %410
        %412 = vrot.lane.b32.xlu0 %v376, 8
        %v413 = vpop.permute.xlu0 %412
        %414 = vrot.lane.b32.xlu0 %v378, 8
        %v415 = vpop.permute.xlu0 %414
        %416 = vrot.lane.b32.xlu0 %v381, 8
        %v417 = vpop.permute.xlu0 %416
        %418 = vrot.lane.b32.xlu0 %v383, 8
        %v419 = vpop.permute.xlu0 %418
        %420 = vrot.lane.b32.xlu0 %v386, 8
        %v421 = vpop.permute.xlu0 %420
        %422 = vrot.lane.b32.xlu0 %v388, 8
        %v423 = vpop.permute.xlu0 %422
        %424 = vrot.lane.b32.xlu0 %v391, 8
        %v425 = vpop.permute.xlu0 %424
        %426 = vrot.lane.b32.xlu0 %v393, 8
        %v427 = vpop.permute.xlu0 %426
        %428 = vrot.lane.b32.xlu0 %v396, 8
        %v429 = vpop.permute.xlu0 %428
        %430 = vrot.lane.b32.xlu0 %v398, 8
        %v431 = vpop.permute.xlu0 %430
        %432 = vrot.lane.b32.xlu0 %v401, 8
        %v433 = vpop.permute.xlu0 %432
        %434 = vrot.lane.b32.xlu0 %v403, 8
        %v435 = vpop.permute.xlu0 %434
        %vm452 = vcmask 97344
        %453 = vst.msk [vmem:[#allocation2] sm:$0xff] %vm452, %v405
        %454 = vst.msk [vmem:[#allocation2 + $0x8] sm:$0xff] %vm452, %v407
        %455 = vst.msk [vmem:[#allocation2 + $0x10] sm:$0xff] %vm452, %v409
        %456 = vst.msk [vmem:[#allocation2 + $0x18] sm:$0xff] %vm452, %v411
        %457 = vst.msk [vmem:[#allocation2 + $0x20] sm:$0xff] %vm452, %v413
        %458 = vst.msk [vmem:[#allocation2 + $0x28] sm:$0xff] %vm452, %v415
        %459 = vst.msk [vmem:[#allocation2 + $0x30] sm:$0xff] %vm452, %v417
        %460 = vst.msk [vmem:[#allocation2 + $0x38] sm:$0xff] %vm452, %v419
        %461 = vst.msk [vmem:[#allocation2 + $0x40] sm:$0xff] %vm452, %v421
        %462 = vst.msk [vmem:[#allocation2 + $0x48] sm:$0xff] %vm452, %v423
        %463 = vst.msk [vmem:[#allocation2 + $0x50] sm:$0xff] %vm452, %v425
        %464 = vst.msk [vmem:[#allocation2 + $0x58] sm:$0xff] %vm452, %v427
        %465 = vst.msk [vmem:[#allocation2 + $0x60] sm:$0xff] %vm452, %v429
        %466 = vst.msk [vmem:[#allocation2 + $0x68] sm:$0xff] %vm452, %v431
        %467 = vst.msk [vmem:[#allocation2 + $0x70] sm:$0xff] %vm452, %v433
        %468 = vst.msk [vmem:[#allocation2 + $0x78] sm:$0xff] %vm452, %v435
        %471 = vrot.lane.b32.xlu0 %v189, 12
        %v472 = vpop.permute.xlu0 %471
        %473 = vrot.lane.b32.xlu0 %v190, 12
        %v474 = vpop.permute.xlu0 %473
        %475 = vrot.lane.b32.xlu0 %v192, 12
        %v476 = vpop.permute.xlu0 %475
        %477 = vrot.lane.b32.xlu0 %v193, 12
        %v478 = vpop.permute.xlu0 %477
        %479 = vrot.lane.b32.xlu0 %v195, 12
        %v480 = vpop.permute.xlu0 %479
        %481 = vrot.lane.b32.xlu0 %v196, 12
        %v482 = vpop.permute.xlu0 %481
        %483 = vrot.lane.b32.xlu0 %v198, 12
        %v484 = vpop.permute.xlu0 %483
        %485 = vrot.lane.b32.xlu0 %v199, 12
        %v486 = vpop.permute.xlu0 %485
        %487 = vrot.lane.b32.xlu0 %v201, 12
        %v488 = vpop.permute.xlu0 %487
        %489 = vrot.lane.b32.xlu0 %v202, 12
        %v490 = vpop.permute.xlu0 %489
        %491 = vrot.lane.b32.xlu0 %v204, 12
        %v492 = vpop.permute.xlu0 %491
        %493 = vrot.lane.b32.xlu0 %v205, 12
        %v494 = vpop.permute.xlu0 %493
        %495 = vrot.lane.b32.xlu0 %v207, 12
        %v496 = vpop.permute.xlu0 %495
        %497 = vrot.lane.b32.xlu0 %v208, 12
        %v498 = vpop.permute.xlu0 %497
        %499 = vrot.lane.b32.xlu0 %v210, 12
        %v500 = vpop.permute.xlu0 %499
        %501 = vrot.lane.b32.xlu0 %v211, 12
        %v502 = vpop.permute.xlu0 %501
        %vm519 = vcmask 130144
        %520 = vst.msk [vmem:[#allocation2] sm:$0xff] %vm519, %v472
        %521 = vst.msk [vmem:[#allocation2 + $0x8] sm:$0xff] %vm519, %v474
        %522 = vst.msk [vmem:[#allocation2 + $0x10] sm:$0xff] %vm519, %v476
        %523 = vst.msk [vmem:[#allocation2 + $0x18] sm:$0xff] %vm519, %v478
        %524 = vst.msk [vmem:[#allocation2 + $0x20] sm:$0xff] %vm519, %v480
        %525 = vst.msk [vmem:[#allocation2 + $0x28] sm:$0xff] %vm519, %v482
        %526 = vst.msk [vmem:[#allocation2 + $0x30] sm:$0xff] %vm519, %v484
        %527 = vst.msk [vmem:[#allocation2 + $0x38] sm:$0xff] %vm519, %v486
        %528 = vst.msk [vmem:[#allocation2 + $0x40] sm:$0xff] %vm519, %v488
        %529 = vst.msk [vmem:[#allocation2 + $0x48] sm:$0xff] %vm519, %v490
        %530 = vst.msk [vmem:[#allocation2 + $0x50] sm:$0xff] %vm519, %v492
        %531 = vst.msk [vmem:[#allocation2 + $0x58] sm:$0xff] %vm519, %v494
        %532 = vst.msk [vmem:[#allocation2 + $0x60] sm:$0xff] %vm519, %v496
        %533 = vst.msk [vmem:[#allocation2 + $0x68] sm:$0xff] %vm519, %v498
        %534 = vst.msk [vmem:[#allocation2 + $0x70] sm:$0xff] %vm519, %v500
        %535 = vst.msk [vmem:[#allocation2 + $0x78] sm:$0xff] %vm519, %v502
        %v537 = vrot.slane %v210, 1
        %v538 = vrot.slane %v211, 1
        %v539 = vsel %vm257, %v537, %v538
        %v540 = vrot.slane %v212, 1
        %v541 = vsel %vm257, %v538, %v540
        %542 = vrot.lane.b32.xlu0 %v265, 16
        %v543 = vpop.permute.xlu0 %542
        %544 = vrot.lane.b32.xlu0 %v267, 16
        %v545 = vpop.permute.xlu0 %544
        %546 = vrot.lane.b32.xlu0 %v270, 16
        %v547 = vpop.permute.xlu0 %546
        %548 = vrot.lane.b32.xlu0 %v272, 16
        %v549 = vpop.permute.xlu0 %548
        %550 = vrot.lane.b32.xlu0 %v275, 16
        %v551 = vpop.permute.xlu0 %550
        %552 = vrot.lane.b32.xlu0 %v277, 16
        %v553 = vpop.permute.xlu0 %552
        %554 = vrot.lane.b32.xlu0 %v280, 16
        %v555 = vpop.permute.xlu0 %554
        %556 = vrot.lane.b32.xlu0 %v282, 16
        %v557 = vpop.permute.xlu0 %556
        %558 = vrot.lane.b32.xlu0 %v285, 16
        %v559 = vpop.permute.xlu0 %558
        %560 = vrot.lane.b32.xlu0 %v287, 16
        %v561 = vpop.permute.xlu0 %560
        %562 = vrot.lane.b32.xlu0 %v290, 16
        %v563 = vpop.permute.xlu0 %562
        %564 = vrot.lane.b32.xlu0 %v292, 16
        %v565 = vpop.permute.xlu0 %564
        %566 = vrot.lane.b32.xlu0 %v295, 16
        %v567 = vpop.permute.xlu0 %566
        %568 = vrot.lane.b32.xlu0 %v297, 16
        %v569 = vpop.permute.xlu0 %568
        %570 = vrot.lane.b32.xlu0 %v539, 16
        %v571 = vpop.permute.xlu0 %570
        %572 = vrot.lane.b32.xlu0 %v541, 16
        %v573 = vpop.permute.xlu0 %572
        %vm590 = vcmask 162944
        %591 = vst.msk [vmem:[#allocation2] sm:$0xff] %vm590, %v543
        %592 = vst.msk [vmem:[#allocation2 + $0x8] sm:$0xff] %vm590, %v545
        %593 = vst.msk [vmem:[#allocation2 + $0x10] sm:$0xff] %vm590, %v547
        %594 = vst.msk [vmem:[#allocation2 + $0x18] sm:$0xff] %vm590, %v549
        %595 = vst.msk [vmem:[#allocation2 + $0x20] sm:$0xff] %vm590, %v551
        %596 = vst.msk [vmem:[#allocation2 + $0x28] sm:$0xff] %vm590, %v553
        %597 = vst.msk [vmem:[#allocation2 + $0x30] sm:$0xff] %vm590, %v555
        %598 = vst.msk [vmem:[#allocation2 + $0x38] sm:$0xff] %vm590, %v557
        %599 = vst.msk [vmem:[#allocation2 + $0x40] sm:$0xff] %vm590, %v559
        %600 = vst.msk [vmem:[#allocation2 + $0x48] sm:$0xff] %vm590, %v561
        %601 = vst.msk [vmem:[#allocation2 + $0x50] sm:$0xff] %vm590, %v563
        %602 = vst.msk [vmem:[#allocation2 + $0x58] sm:$0xff] %vm590, %v565
        %603 = vst.msk [vmem:[#allocation2 + $0x60] sm:$0xff] %vm590, %v567
        %604 = vst.msk [vmem:[#allocation2 + $0x68] sm:$0xff] %vm590, %v569
        %605 = vst.msk [vmem:[#allocation2 + $0x70] sm:$0xff] %vm590, %v571
        %606 = vst.msk [vmem:[#allocation2 + $0x78] sm:$0xff] %vm590, %v573
        %v607 = vrot.slane %v210, 2
        %v608 = vrot.slane %v211, 2
        %v609 = vsel %vm363, %v607, %v608
        %v610 = vrot.slane %v212, 2
        %v611 = vsel %vm363, %v608, %v610
        %612 = vrot.lane.b32.xlu0 %v371, 20
        %v613 = vpop.permute.xlu0 %612
        %614 = vrot.lane.b32.xlu0 %v373, 20
        %v615 = vpop.permute.xlu0 %614
        %616 = vrot.lane.b32.xlu0 %v376, 20
        %v617 = vpop.permute.xlu0 %616
        %618 = vrot.lane.b32.xlu0 %v378, 20
        %v619 = vpop.permute.xlu0 %618
        %620 = vrot.lane.b32.xlu0 %v381, 20
        %v621 = vpop.permute.xlu0 %620
        %622 = vrot.lane.b32.xlu0 %v383, 20
        %v623 = vpop.permute.xlu0 %622
        %624 = vrot.lane.b32.xlu0 %v386, 20
        %v625 = vpop.permute.xlu0 %624
        %626 = vrot.lane.b32.xlu0 %v388, 20
        %v627 = vpop.permute.xlu0 %626
        %628 = vrot.lane.b32.xlu0 %v391, 20
        %v629 = vpop.permute.xlu0 %628
        %630 = vrot.lane.b32.xlu0 %v393, 20
        %v631 = vpop.permute.xlu0 %630
        %632 = vrot.lane.b32.xlu0 %v396, 20
        %v633 = vpop.permute.xlu0 %632
        %634 = vrot.lane.b32.xlu0 %v398, 20
        %v635 = vpop.permute.xlu0 %634
        %636 = vrot.lane.b32.xlu0 %v401, 20
        %v637 = vpop.permute.xlu0 %636
        %638 = vrot.lane.b32.xlu0 %v403, 20
        %v639 = vpop.permute.xlu0 %638
        %640 = vrot.lane.b32.xlu0 %v609, 20
        %v641 = vpop.permute.xlu0 %640
        %642 = vrot.lane.b32.xlu0 %v611, 20
        %v643 = vpop.permute.xlu0 %642
        %vm660 = vcmask 195744
        %661 = vst.msk [vmem:[#allocation2] sm:$0xff] %vm660, %v613
        %662 = vst.msk [vmem:[#allocation2 + $0x8] sm:$0xff] %vm660, %v615
        %663 = vst.msk [vmem:[#allocation2 + $0x10] sm:$0xff] %vm660, %v617
        %664 = vst.msk [vmem:[#allocation2 + $0x18] sm:$0xff] %vm660, %v619
        %665 = vst.msk [vmem:[#allocation2 + $0x20] sm:$0xff] %vm660, %v621
        %666 = vst.msk [vmem:[#allocation2 + $0x28] sm:$0xff] %vm660, %v623
        %667 = vst.msk [vmem:[#allocation2 + $0x30] sm:$0xff] %vm660, %v625
        %668 = vst.msk [vmem:[#allocation2 + $0x38] sm:$0xff] %vm660, %v627
        %669 = vst.msk [vmem:[#allocation2 + $0x40] sm:$0xff] %vm660, %v629
        %670 = vst.msk [vmem:[#allocation2 + $0x48] sm:$0xff] %vm660, %v631
        %671 = vst.msk [vmem:[#allocation2 + $0x50] sm:$0xff] %vm660, %v633
        %672 = vst.msk [vmem:[#allocation2 + $0x58] sm:$0xff] %vm660, %v635
        %673 = vst.msk [vmem:[#allocation2 + $0x60] sm:$0xff] %vm660, %v637
        %674 = vst.msk [vmem:[#allocation2 + $0x68] sm:$0xff] %vm660, %v639
        %675 = vst.msk [vmem:[#allocation2 + $0x70] sm:$0xff] %vm660, %v641
        %676 = vst.msk [vmem:[#allocation2 + $0x78] sm:$0xff] %vm660, %v643
        %679 = vrot.lane.b32.xlu0 %v192, 24
        %v680 = vpop.permute.xlu0 %679
        %681 = vrot.lane.b32.xlu0 %v193, 24
        %v682 = vpop.permute.xlu0 %681
        %683 = vrot.lane.b32.xlu0 %v195, 24
        %v684 = vpop.permute.xlu0 %683
        %685 = vrot.lane.b32.xlu0 %v196, 24
        %v686 = vpop.permute.xlu0 %685
        %687 = vrot.lane.b32.xlu0 %v198, 24
        %v688 = vpop.permute.xlu0 %687
        %689 = vrot.lane.b32.xlu0 %v199, 24
        %v690 = vpop.permute.xlu0 %689
        %691 = vrot.lane.b32.xlu0 %v201, 24
        %v692 = vpop.permute.xlu0 %691
        %693 = vrot.lane.b32.xlu0 %v202, 24
        %v694 = vpop.permute.xlu0 %693
        %695 = vrot.lane.b32.xlu0 %v204, 24
        %v696 = vpop.permute.xlu0 %695
        %697 = vrot.lane.b32.xlu0 %v205, 24
        %v698 = vpop.permute.xlu0 %697
        %699 = vrot.lane.b32.xlu0 %v207, 24
        %v700 = vpop.permute.xlu0 %699
        %701 = vrot.lane.b32.xlu0 %v208, 24
        %v702 = vpop.permute.xlu0 %701
        %703 = vrot.lane.b32.xlu0 %v210, 24
        %v704 = vpop.permute.xlu0 %703
        %705 = vrot.lane.b32.xlu0 %v211, 24
        %v706 = vpop.permute.xlu0 %705
        %707 = vrot.lane.b32.xlu0 %v213, 24
        %v708 = vpop.permute.xlu0 %707
        %709 = vrot.lane.b32.xlu0 %v214, 24
        %v710 = vpop.permute.xlu0 %709
        %vm727 = vcmask 228544
        %728 = vst.msk [vmem:[#allocation2] sm:$0xff] %vm727, %v680
        %729 = vst.msk [vmem:[#allocation2 + $0x8] sm:$0xff] %vm727, %v682
        %730 = vst.msk [vmem:[#allocation2 + $0x10] sm:$0xff] %vm727, %v684
        %731 = vst.msk [vmem:[#allocation2 + $0x18] sm:$0xff] %vm727, %v686
        %732 = vst.msk [vmem:[#allocation2 + $0x20] sm:$0xff] %vm727, %v688
        %733 = vst.msk [vmem:[#allocation2 + $0x28] sm:$0xff] %vm727, %v690
        %734 = vst.msk [vmem:[#allocation2 + $0x30] sm:$0xff] %vm727, %v692
        %735 = vst.msk [vmem:[#allocation2 + $0x38] sm:$0xff] %vm727, %v694
        %736 = vst.msk [vmem:[#allocation2 + $0x40] sm:$0xff] %vm727, %v696
        %737 = vst.msk [vmem:[#allocation2 + $0x48] sm:$0xff] %vm727, %v698
        %738 = vst.msk [vmem:[#allocation2 + $0x50] sm:$0xff] %vm727, %v700
        %739 = vst.msk [vmem:[#allocation2 + $0x58] sm:$0xff] %vm727, %v702
        %740 = vst.msk [vmem:[#allocation2 + $0x60] sm:$0xff] %vm727, %v704
        %741 = vst.msk [vmem:[#allocation2 + $0x68] sm:$0xff] %vm727, %v706
        %742 = vst.msk [vmem:[#allocation2 + $0x70] sm:$0xff] %vm727, %v708
        %743 = vst.msk [vmem:[#allocation2 + $0x78] sm:$0xff] %vm727, %v710
        %v745 = vrot.slane %v213, 1
        %v746 = vrot.slane %v214, 1
        %v747 = vsel %vm257, %v745, %v746
        %v748 = vrot.slane %v215, 1
        %v749 = vsel %vm257, %v746, %v748
        %750 = vrot.lane.b32.xlu0 %v270, 28
        %v751 = vpop.permute.xlu0 %750
        %752 = vrot.lane.b32.xlu0 %v272, 28
        %v753 = vpop.permute.xlu0 %752
        %754 = vrot.lane.b32.xlu0 %v275, 28
        %v755 = vpop.permute.xlu0 %754
        %756 = vrot.lane.b32.xlu0 %v277, 28
        %v757 = vpop.permute.xlu0 %756
        %758 = vrot.lane.b32.xlu0 %v280, 28
        %v759 = vpop.permute.xlu0 %758
        %760 = vrot.lane.b32.xlu0 %v282, 28
        %v761 = vpop.permute.xlu0 %760
        %762 = vrot.lane.b32.xlu0 %v285, 28
        %v763 = vpop.permute.xlu0 %762
        %764 = vrot.lane.b32.xlu0 %v287, 28
        %v765 = vpop.permute.xlu0 %764
        %766 = vrot.lane.b32.xlu0 %v290, 28
        %v767 = vpop.permute.xlu0 %766
        %768 = vrot.lane.b32.xlu0 %v292, 28
        %v769 = vpop.permute.xlu0 %768
        %770 = vrot.lane.b32.xlu0 %v295, 28
        %v771 = vpop.permute.xlu0 %770
        %772 = vrot.lane.b32.xlu0 %v297, 28
        %v773 = vpop.permute.xlu0 %772
        %774 = vrot.lane.b32.xlu0 %v539, 28
        %v775 = vpop.permute.xlu0 %774
        %776 = vrot.lane.b32.xlu0 %v541, 28
        %v777 = vpop.permute.xlu0 %776
        %778 = vrot.lane.b32.xlu0 %v747, 28
        %v779 = vpop.permute.xlu0 %778
        %780 = vrot.lane.b32.xlu0 %v749, 28
        %v781 = vpop.permute.xlu0 %780
        %vm798 = vcmask 261344
        %799 = vst.msk [vmem:[#allocation2] sm:$0xff] %vm798, %v751
        %800 = vst.msk [vmem:[#allocation2 + $0x8] sm:$0xff] %vm798, %v753
        %801 = vst.msk [vmem:[#allocation2 + $0x10] sm:$0xff] %vm798, %v755
        %802 = vst.msk [vmem:[#allocation2 + $0x18] sm:$0xff] %vm798, %v757
        %803 = vst.msk [vmem:[#allocation2 + $0x20] sm:$0xff] %vm798, %v759
        %804 = vst.msk [vmem:[#allocation2 + $0x28] sm:$0xff] %vm798, %v761
        %805 = vst.msk [vmem:[#allocation2 + $0x30] sm:$0xff] %vm798, %v763
        %806 = vst.msk [vmem:[#allocation2 + $0x38] sm:$0xff] %vm798, %v765
        %807 = vst.msk [vmem:[#allocation2 + $0x40] sm:$0xff] %vm798, %v767
        %808 = vst.msk [vmem:[#allocation2 + $0x48] sm:$0xff] %vm798, %v769
        %809 = vst.msk [vmem:[#allocation2 + $0x50] sm:$0xff] %vm798, %v771
        %810 = vst.msk [vmem:[#allocation2 + $0x58] sm:$0xff] %vm798, %v773
        %811 = vst.msk [vmem:[#allocation2 + $0x60] sm:$0xff] %vm798, %v775
        %812 = vst.msk [vmem:[#allocation2 + $0x68] sm:$0xff] %vm798, %v777
        %813 = vst.msk [vmem:[#allocation2 + $0x70] sm:$0xff] %vm798, %v779
        %814 = vst.msk [vmem:[#allocation2 + $0x78] sm:$0xff] %vm798, %v781
        %v815 = vrot.slane %v213, 2
        %v816 = vrot.slane %v214, 2
        %v817 = vsel %vm363, %v815, %v816
        %v818 = vrot.slane %v215, 2
        %v819 = vsel %vm363, %v816, %v818
        %820 = vrot.lane.b32.xlu0 %v376, 32
        %v821 = vpop.permute.xlu0 %820
        %822 = vrot.lane.b32.xlu0 %v378, 32
        %v823 = vpop.permute.xlu0 %822
        %824 = vrot.lane.b32.xlu0 %v381, 32
        %v825 = vpop.permute.xlu0 %824
        %826 = vrot.lane.b32.xlu0 %v383, 32
        %v827 = vpop.permute.xlu0 %826
        %828 = vrot.lane.b32.xlu0 %v386, 32
        %v829 = vpop.permute.xlu0 %828
        %830 = vrot.lane.b32.xlu0 %v388, 32
        %v831 = vpop.permute.xlu0 %830
        %832 = vrot.lane.b32.xlu0 %v391, 32
        %v833 = vpop.permute.xlu0 %832
        %834 = vrot.lane.b32.xlu0 %v393, 32
        %v835 = vpop.permute.xlu0 %834
        %836 = vrot.lane.b32.xlu0 %v396, 32
        %v837 = vpop.permute.xlu0 %836
        %838 = vrot.lane.b32.xlu0 %v398, 32
        %v839 = vpop.permute.xlu0 %838
        %840 = vrot.lane.b32.xlu0 %v401, 32
        %v841 = vpop.permute.xlu0 %840
        %842 = vrot.lane.b32.xlu0 %v403, 32
        %v843 = vpop.permute.xlu0 %842
        %844 = vrot.lane.b32.xlu0 %v609, 32
        %v845 = vpop.permute.xlu0 %844
        %846 = vrot.lane.b32.xlu0 %v611, 32
        %v847 = vpop.permute.xlu0 %846
        %848 = vrot.lane.b32.xlu0 %v817, 32
        %v849 = vpop.permute.xlu0 %848
        %850 = vrot.lane.b32.xlu0 %v819, 32
        %v851 = vpop.permute.xlu0 %850
        %vm868 = vcmask 294144
        %869 = vst.msk [vmem:[#allocation2] sm:$0xff] %vm868, %v821
        %870 = vst.msk [vmem:[#allocation2 + $0x8] sm:$0xff] %vm868, %v823
        %871 = vst.msk [vmem:[#allocation2 + $0x10] sm:$0xff] %vm868, %v825
        %872 = vst.msk [vmem:[#allocation2 + $0x18] sm:$0xff] %vm868, %v827
        %873 = vst.msk [vmem:[#allocation2 + $0x20] sm:$0xff] %vm868, %v829
        %874 = vst.msk [vmem:[#allocation2 + $0x28] sm:$0xff] %vm868, %v831
        %875 = vst.msk [vmem:[#allocation2 + $0x30] sm:$0xff] %vm868, %v833
        %876 = vst.msk [vmem:[#allocation2 + $0x38] sm:$0xff] %vm868, %v835
        %877 = vst.msk [vmem:[#allocation2 + $0x40] sm:$0xff] %vm868, %v837
        %878 = vst.msk [vmem:[#allocation2 + $0x48] sm:$0xff] %vm868, %v839
        %879 = vst.msk [vmem:[#allocation2 + $0x50] sm:$0xff] %vm868, %v841
        %880 = vst.msk [vmem:[#allocation2 + $0x58] sm:$0xff] %vm868, %v843
        %881 = vst.msk [vmem:[#allocation2 + $0x60] sm:$0xff] %vm868, %v845
        %882 = vst.msk [vmem:[#allocation2 + $0x68] sm:$0xff] %vm868, %v847
        %883 = vst.msk [vmem:[#allocation2 + $0x70] sm:$0xff] %vm868, %v849
        %884 = vst.msk [vmem:[#allocation2 + $0x78] sm:$0xff] %vm868, %v851
        %v885 = vld [vmem:[#allocation2] sm:$0xff]
        %v886 = vld [vmem:[#allocation2 + $0x8] sm:$0xff]
        %v887 = vld [vmem:[#allocation2 + $0x10] sm:$0xff]
        %v888 = vld [vmem:[#allocation2 + $0x18] sm:$0xff]
        %v889 = vld [vmem:[#allocation2 + $0x20] sm:$0xff]
        %v890 = vld [vmem:[#allocation2 + $0x28] sm:$0xff]
        %v891 = vld [vmem:[#allocation2 + $0x30] sm:$0xff]
        %v892 = vld [vmem:[#allocation2 + $0x38] sm:$0xff]
        %v893 = vld [vmem:[#allocation2 + $0x40] sm:$0xff]
        %v894 = vld [vmem:[#allocation2 + $0x48] sm:$0xff]
        %v895 = vld [vmem:[#allocation2 + $0x50] sm:$0xff]
        %v896 = vld [vmem:[#allocation2 + $0x58] sm:$0xff]
        %v897 = vld [vmem:[#allocation2 + $0x60] sm:$0xff]
        %v898 = vld [vmem:[#allocation2 + $0x68] sm:$0xff]
        %v899 = vld [vmem:[#allocation2 + $0x70] sm:$0xff]
        %v900 = vld [vmem:[#allocation2 + $0x78] sm:$0xff]
        %v901 = vld [vmem:[%s1] sm:$0xff]
        %v902 = vld [vmem:[%s1 + $0x8] sm:$0xff]
        %v903 = vld [vmem:[%s1 + $0x10] sm:$0xff]
        %v904 = vld [vmem:[%s1 + $0x18] sm:$0xff]
        %v905 = vld [vmem:[%s1 + $0x20] sm:$0xf]
        %vm906 = vcmask 293888
        %v908 = vsel %vm906, %v885, 0
        %v911 = vsel %vm906, %v886, 0
        %v914 = vsel %vm906, %v887, 0
        %v917 = vsel %vm906, %v888, 0
        %v920 = vsel %vm906, %v889, 0
        %v923 = vsel %vm906, %v890, 0
        %v926 = vsel %vm906, %v891, 0
        %v929 = vsel %vm906, %v892, 0
        %v932 = vsel %vm906, %v893, 0
        %v935 = vsel %vm906, %v894, 0
        %v938 = vsel %vm906, %v895, 0
        %v941 = vsel %vm906, %v896, 0
        %v944 = vsel %vm906, %v897, 0
        %v947 = vsel %vm906, %v898, 0
        %v950 = vsel %vm906, %v899, 0
        %v953 = vsel %vm906, %v900, 0
        %vm955 = vcmask 1043456
        %v957 = vsel %vm955, %v905, 0
        %959 = vmatprep.subr.mxu0 0.0
        %960 = vmatpush1.msra.mxu0 0.0
        %961 = vmatprep.subr.mxu0 0.0
        %962 = vmatpush1.msra.mxu0 0.0
        %963 = vmatprep.subr.mxu0 0.0
        %964 = vmatpush1.msra.mxu0 0.0
        %965 = vmatprep.subr.mxu0 0.0
        %966 = vmatpush1.msra.mxu0 0.0
        %967 = vmatprep.subr.mxu0 0.0
        %968 = vmatpush1.msra.mxu0 0.0
        %969 = vmatprep.subr.mxu0 0.0
        %970 = vmatpush1.msra.mxu0 0.0
        %971 = vmatprep.subr.mxu0 0.0
        %972 = vmatpush1.msra.mxu0 0.0
        %973 = vmatprep.subr.mxu0 0.0
        %974 = vmatpush1.msra.mxu0 0.0
        %975 = vmatprep.subr.mxu0 0.0
        %976 = vmatpush1.msra.mxu0 0.0
        %977 = vmatprep.subr.mxu0 0.0
        %978 = vmatpush1.msra.mxu0 0.0
        %979 = vmatprep.subr.mxu0 0.0
        %980 = vmatpush1.msra.mxu0 0.0
        %981 = vmatprep.subr.mxu0 0.0
        %982 = vmatpush1.msra.mxu0 %v957
        %983 = vmatprep.subr.mxu0 0.0
        %984 = vmatpush1.msra.mxu0 %v904
        %985 = vmatprep.subr.mxu0 0.0
        %986 = vmatpush1.msra.mxu0 %v903
        %987 = vmatprep.subr.mxu0 0.0
        %988 = vmatpush1.msra.mxu0 %v902
        %989 = vmatprep.subr.mxu0 0.0
        %990 = vmatpush1.msra.mxu0 %v901
        %991 = vmatprep.subr.mxu0 0.0
        %992 = vmatpush2.msra.mxu0 0.0
        %993 = vmatprep.subr.mxu0 0.0
        %994 = vmatpush2.msra.mxu0 0.0
        %995 = vmatprep.subr.mxu0 0.0
        %996 = vmatpush2.msra.mxu0 0.0
        %997 = vmatprep.subr.mxu0 0.0
        %998 = vmatpush2.msra.mxu0 0.0
        %999 = vmatprep.subr.mxu0 0.0
        %1000 = vmatpush2.msra.mxu0 0.0
        %1001 = vmatprep.subr.mxu0 0.0
        %1002 = vmatpush2.msra.mxu0 0.0
        %1003 = vmatprep.subr.mxu0 0.0
        %1004 = vmatpush2.msra.mxu0 0.0
        %1005 = vmatprep.subr.mxu0 0.0
        %1006 = vmatpush2.msra.mxu0 0.0
        %1007 = vmatprep.subr.mxu0 0.0
        %1008 = vmatpush2.msra.mxu0 0.0
        %1009 = vmatprep.subr.mxu0 0.0
        %1010 = vmatpush2.msra.mxu0 0.0
        %1011 = vmatprep.subr.mxu0 0.0
        %1012 = vmatpush2.msra.mxu0 0.0
        %1013 = vmatprep.subr.mxu0 0.0
        %1014 = vmatpush2.msra.mxu0 0.0
        %1015 = vmatprep.subr.mxu0 0.0
        %1016 = vmatpush2.msra.mxu0 0.0
        %1017 = vmatprep.subr.mxu0 0.0
        %1018 = vmatpush2.msra.mxu0 0.0
        %1019 = vmatprep.subr.mxu0 0.0
        %1020 = vmatpush2.msra.mxu0 0.0
        %1021 = vmatprep.subr.mxu0 0.0
        %1022 = vmatpush2.msra.mxu0 0.0
        %1023 = vmatprep.mubr.f32.mxu0 0.0
        %1024 = vmatmul.mubr.f32.gmra.mxu0 %v908
        %v1025 = vpop.f32.mrf.mxu0
        %v1026 = vadd.f32 0.0, %v1025
        %v1027 = vpop.f32.mrf.mxu0
        %1028 = vmatprep.mubr.f32.mxu0 0.0
        %1029 = vmatmul.mubr.f32.gmra.mxu0 %v911
        %v1030 = vpop.f32.mrf.mxu0
        %v1031 = vadd.f32 0.0, %v1030
        %v1032 = vpop.f32.mrf.mxu0
        %1033 = vmatprep.mubr.f32.mxu0 0.0
        %1034 = vmatmul.mubr.f32.gmra.mxu0 %v914
        %v1035 = vpop.f32.mrf.mxu0
        %v1036 = vadd.f32 0.0, %v1035
        %v1037 = vpop.f32.mrf.mxu0
        %1038 = vmatprep.mubr.f32.mxu0 0.0
        %1039 = vmatmul.mubr.f32.gmra.mxu0 %v917
        %v1040 = vpop.f32.mrf.mxu0
        %v1041 = vadd.f32 0.0, %v1040
        %v1042 = vpop.f32.mrf.mxu0
        %1043 = vmatprep.mubr.f32.mxu0 0.0
        %1044 = vmatmul.mubr.f32.gmra.mxu0 %v920
        %v1045 = vpop.f32.mrf.mxu0
        %v1046 = vadd.f32 0.0, %v1045
        %v1047 = vpop.f32.mrf.mxu0
        %1048 = vmatprep.mubr.f32.mxu0 0.0
        %1049 = vmatmul.mubr.f32.gmra.mxu0 %v923
        %v1050 = vpop.f32.mrf.mxu0
        %v1051 = vadd.f32 0.0, %v1050
        %v1052 = vpop.f32.mrf.mxu0
        %1053 = vmatprep.mubr.f32.mxu0 0.0
        %1054 = vmatmul.mubr.f32.gmra.mxu0 %v926
        %v1055 = vpop.f32.mrf.mxu0
        %v1056 = vadd.f32 0.0, %v1055
        %v1057 = vpop.f32.mrf.mxu0
        %1058 = vmatprep.mubr.f32.mxu0 0.0
        %1059 = vmatmul.mubr.f32.gmra.mxu0 %v929
        %v1060 = vpop.f32.mrf.mxu0
        %v1061 = vadd.f32 0.0, %v1060
        %v1062 = vpop.f32.mrf.mxu0
        %1063 = vmatprep.mubr.f32.mxu0 0.0
        %1064 = vmatmul.mubr.f32.gmra.mxu0 %v932
        %v1065 = vpop.f32.mrf.mxu0
        %v1066 = vadd.f32 0.0, %v1065
        %v1067 = vpop.f32.mrf.mxu0
        %1068 = vmatprep.mubr.f32.mxu0 0.0
        %1069 = vmatmul.mubr.f32.gmra.mxu0 %v935
        %v1070 = vpop.f32.mrf.mxu0
        %v1071 = vadd.f32 0.0, %v1070
        %v1072 = vpop.f32.mrf.mxu0
        %1073 = vmatprep.mubr.f32.mxu0 0.0
        %1074 = vmatmul.mubr.f32.gmra.mxu0 %v938
        %v1075 = vpop.f32.mrf.mxu0
        %v1076 = vadd.f32 0.0, %v1075
        %v1077 = vpop.f32.mrf.mxu0
        %1078 = vmatprep.mubr.f32.mxu0 0.0
        %1079 = vmatmul.mubr.f32.gmra.mxu0 %v941
        %v1080 = vpop.f32.mrf.mxu0
        %v1081 = vadd.f32 0.0, %v1080
        %v1082 = vpop.f32.mrf.mxu0
        %1083 = vmatprep.mubr.f32.mxu0 0.0
        %1084 = vmatmul.mubr.f32.gmra.mxu0 %v944
        %v1085 = vpop.f32.mrf.mxu0
        %v1086 = vadd.f32 0.0, %v1085
        %v1087 = vpop.f32.mrf.mxu0
        %1088 = vmatprep.mubr.f32.mxu0 0.0
        %1089 = vmatmul.mubr.f32.gmra.mxu0 %v947
        %v1090 = vpop.f32.mrf.mxu0
        %v1091 = vadd.f32 0.0, %v1090
        %v1092 = vpop.f32.mrf.mxu0
        %1093 = vmatprep.mubr.f32.mxu0 0.0
        %1094 = vmatmul.mubr.f32.gmra.mxu0 %v950
        %v1095 = vpop.f32.mrf.mxu0
        %v1096 = vadd.f32 0.0, %v1095
        %v1097 = vpop.f32.mrf.mxu0
        %1098 = vmatprep.mubr.f32.mxu0 0.0
        %1099 = vmatmul.mubr.f32.gmra.mxu0 %v953
        %v1100 = vpop.f32.mrf.mxu0
        %v1101 = vadd.f32 0.0, %v1100
        %v1102 = vpop.f32.mrf.mxu0
        %1103 = vdwg.mxu0
        %1104 = vxpose.xlu0.b32.start [1/16] %v1026, 128
        %1105 = vxpose.xlu0.b32.cont [2/16] %v1031, 128
        %1106 = vxpose.xlu0.b32.cont [3/16] %v1036, 128
        %1107 = vxpose.xlu0.b32.cont [4/16] %v1041, 128
        %1108 = vxpose.xlu0.b32.cont [5/16] %v1046, 128
        %1109 = vxpose.xlu0.b32.cont [6/16] %v1051, 128
        %1110 = vxpose.xlu0.b32.cont [7/16] %v1056, 128
        %1111 = vxpose.xlu0.b32.cont [8/16] %v1061, 128
        %1112 = vxpose.xlu0.b32.cont [9/16] %v1066, 128
        %1113 = vxpose.xlu0.b32.cont [10/16] %v1071, 128
        %1114 = vxpose.xlu0.b32.cont [11/16] %v1076, 128
        %1115 = vxpose.xlu0.b32.cont [12/16] %v1081, 128
        %1116 = vxpose.xlu0.b32.cont [13/16] %v1086, 128
        %1117 = vxpose.xlu0.b32.cont [14/16] %v1091, 128
        %1118 = vxpose.xlu0.b32.cont [15/16] %v1096, 128
        %1119 = vxpose.xlu0.b32.end [16/16] %v1101, 128
        %v1120 = vpop.trf.xlu0
        %v1121 = vpop.trf.xlu0
        %v1122 = vpop.trf.xlu0
        %v1123 = vpop.trf.xlu0
        %v1124 = vpop.trf.xlu0
        %v1125 = vpop.trf.xlu0
        %v1126 = vpop.trf.xlu0
        %v1127 = vpop.trf.xlu0
        %v1128 = vpop.trf.xlu0
        %v1129 = vpop.trf.xlu0
        %v1130 = vpop.trf.xlu0
        %v1131 = vpop.trf.xlu0
        %v1132 = vpop.trf.xlu0
        %v1133 = vpop.trf.xlu0
        %v1134 = vpop.trf.xlu0
        %v1135 = vpop.trf.xlu0
        %v1136 = vld [vmem:[%s2] sm:$0xff]
        %1138 = vset.pattern.permute.xlu0 0
        %1139 = vperm.xlu0 %1138, %v1136
        %v1140 = vpop.permute.xlu0 %1139
        %v1142 = vadd.f32 %v1120, %v1140
        %v1143 = vmax.f32 %v1142, 0.0
        %1144 = vst [vmem:[%s177] sm:$0xff] %v1143
        %s1145 = sand.u32 %s107, 1
        %s1146 = scalar_lea.sflag [#allocation4], %s1145
        %s1147 = sand.u32 %s107, 1
        %s1148 = smul.addr %s1147, 8
        %s1149 = scalar_lea.vmem [#allocation3], %s1148
        // Predicated region
        $region33: #{tpu_custom_call.1} parent=31 // pred_check
          %p1150 = pneg %p117
        $region34: #{tpu_custom_call.1} parent=31 // pred_check_branch
          %1152 = sbr.rel (%p1150) target = $region36
        $region35: #{tpu_custom_call.1} parent=31 // pred_region
          %s1154 = ssub.s32 128, 128
          %1155 = vsyncadd %s1146, %s1154
          %s1156 = smul.addr %s21, 2
          %s1157 = sadd.s32 %s22, %s1156
          %s1158 = smul.addr %s1157, 128
          %s1159 = scalar_lea.hbm %s3, %s1158
          %s1161 = sshll.u32 %s1149, 4
          %s1162 = int_to_ptr.vmem [resolvable:$true] %s1161
          %1164 = dma.vmem_to_hbm [thread:$0]  %s1162, 128, %s1159, %s1146
        $region36: #{tpu_custom_call.1} parent=31 // pred_fallthru
          _
      $region32: #{tpu_custom_call.1} parent=5 // pred_fallthru
        _
      %p1165 = scmp.le.s32.totalorder 2, %s12
      // Predicated region
      $region37: #{tpu_custom_call.1} parent=5 // pred_check
        %p1166 = pneg %p1165
      $region38: #{tpu_custom_call.1} parent=5 // pred_check_branch
        %1168 = sbr.rel (%p1166) target = $region40
      $region39: #{tpu_custom_call.1} parent=5 // pred_region
        %s1169 = ssub.s32 %s12, 2
        // Predicated region
        $region41: #{tpu_custom_call.1} parent=39 // pred_check
          %p1170 = pneg %p123
        $region42: #{tpu_custom_call.1} parent=39 // pred_check_branch
          %1172 = sbr.rel (%p1170) target = $region44
        $region43: #{tpu_custom_call.1} parent=39 // pred_region
          %s1173 = sand.u32 %s108, 1
          %s1174 = scalar_lea.sflag [#allocation4], %s1173
          %s1175 = sand.u32 %s108, 1
          %s1176 = smul.addr %s1175, 8
          %s1177 = scalar_lea.vmem [#allocation3], %s1176
          %1178 = dma.done %s1174, 128
        $region44: #{tpu_custom_call.1} parent=39 // pred_fallthru
          _
      $region40: #{tpu_custom_call.1} parent=5 // pred_fallthru
        _
    $region6: #{tpu_custom_call.1} parent=1 // loop_footer
      %s16 = sadd.s32 1, %s12
    $region7: #{tpu_custom_call.1} parent=1 // loop_footer_branch
      %11 = sbr.rel target = $region3
    $region8: #{tpu_custom_call.1} parent=1 // loop_exit
      _
    %1179 = vsyncpa [#allocation4], 1
    %s1180 = scalar_lea.sflag [#allocation4], 1
    %1181 = vsyncpa %s1180, 1

</llo_original>
